<compile_context>
chip_gen: v6e
topology: v6e:2x2x1
jax: 0.10.0
libtpu: 0.0.40
codegen_flags: <defaults>
</compile_context>

<pallas_src>
import jax
import jax.numpy as jnp
from jax.experimental import pallas as pl
from jax.experimental.pallas import tpu as pltpu

_PACK = 4                      # samples per 128-lane row (4 * 32 features = 128)
_F_IN, _H1, _H2, _F_OUT = 32, 16, 8, 2


def _round_up(n, m):
    return ((n + m - 1) // m) * m


def _mlp_kernel(x_ref, w_ref, b_ref, o_ref):
    """One batch tile: x (tm, 128) -> o (tm, 8); 4 samples packed per row."""
    x = x_ref[...]                                  # (tm, 128) f32
    b = b_ref[...]                                  # (3, 64)   f32

    # fc1 + ReLU : (tm,128) @ (128,64)   (block-diag of the (32,16) weight)
    h1 = jnp.dot(x, w_ref[0], preferred_element_type=jnp.float32)
    h1 = jnp.maximum(h1 + b[0:1, : _PACK * _H1], 0.0)

    # fc2 + ReLU : (tm,64) @ (64,32)
    w2 = w_ref[1][: _PACK * _H1, : _PACK * _H2]
    h2 = jnp.dot(h1, w2, preferred_element_type=jnp.float32)
    h2 = jnp.maximum(h2 + b[1:2, : _PACK * _H2], 0.0)

    # fc3 + Sigmoid : (tm,32) @ (32,8); logistic lands on the EUP slot.
    w3 = w_ref[2][: _PACK * _H2, : _PACK * _F_OUT]
    z = jnp.dot(h2, w3, preferred_element_type=jnp.float32)
    z = z + b[2:3, : _PACK * _F_OUT]
    o_ref[...] = jax.nn.sigmoid(z).astype(o_ref.dtype)


def _pack_params(params):
    """Block-diagonal (4x) weights padded/stacked into one slab + bias slab."""
    f32 = jnp.float32
    w1, b1 = params["w1"].astype(f32), params["b1"].astype(f32)   # (32,16),(16,)
    w2, b2 = params["w2"].astype(f32), params["b2"].astype(f32)   # (16, 8),( 8,)
    w3, b3 = params["w3"].astype(f32), params["b3"].astype(f32)   # ( 8, 2),( 2,)

    def bd(w):  # block_diag(w, w, w, w)
        return jnp.kron(jnp.eye(_PACK, dtype=f32), w)

    kin, kout = _PACK * _F_IN, _PACK * _H1                        # 128, 64
    w_slab = jnp.zeros((3, kin, kout), f32)
    w_slab = w_slab.at[0].set(bd(w1))                                   # (128,64)
    w_slab = w_slab.at[1, : _PACK * _H1, : _PACK * _H2].set(bd(w2))     # ( 64,32)
    w_slab = w_slab.at[2, : _PACK * _H2, : _PACK * _F_OUT].set(bd(w3))  # ( 32, 8)

    b_slab = jnp.zeros((3, kout), f32)
    b_slab = b_slab.at[0, : _PACK * _H1].set(jnp.tile(b1.reshape(-1), _PACK))
    b_slab = b_slab.at[1, : _PACK * _H2].set(jnp.tile(b2.reshape(-1), _PACK))
    b_slab = b_slab.at[2, : _PACK * _F_OUT].set(jnp.tile(b3.reshape(-1), _PACK))
    return w_slab, b_slab


def mlp_forward(x, params, *, block_rows=8192):
    """x: (B, 32). params: w1,b1,w2,b2,w3,b3; weights stored input-major
    ([in, out], i.e. transposed vs nn.Linear.weight)."""
    B, F = x.shape
    assert F == _F_IN, F

    # ---- pack 4 samples per 128-lane row --------------------------------
    b_pad = _round_up(B, _PACK)
    if b_pad != B:
        x = jnp.concatenate([x, jnp.zeros((b_pad - B, F), x.dtype)], axis=0)
    bp = b_pad // _PACK
    xp = x.reshape(bp, _PACK * _F_IN).astype(jnp.float32)

    w_slab, b_slab = _pack_params(params)

    # ---- batch tile in packed rows (multiple of 8 sublanes) -------------
    tm = min(_round_up(max(block_rows // _PACK, 8), 8), _round_up(bp, 8))
    if bp > 8:
        # keep >= 2 grid steps so both v7x TensorCores get work
        tm = min(tm, _round_up(pl.cdiv(bp, 2), 8))
    grid = (pl.cdiv(bp, tm),)

    # ---- VMEM budget: x/out double buffers + f32 intermediates ----------
    tile_bytes = tm * 128 * 4
    vmem_limit = int(min(max(8 * tile_bytes + (2 << 20), 16 << 20), 48 << 20))

    n_out = _PACK * _F_OUT  # 8
    cost = pl.CostEstimate(
        flops=2 * bp * (128 * 64 + 64 * 32 + 32 * 8),
        transcendentals=b_pad * _F_OUT,
        bytes_accessed=(xp.size * xp.dtype.itemsize + bp * n_out * 4
                        + w_slab.size * 4 + b_slab.size * 4),
    )

    out_packed = pl.pallas_call(
        _mlp_kernel,
        out_shape=jax.ShapeDtypeStruct((bp, n_out), jnp.float32),
        grid=grid,
        in_specs=[
            pl.BlockSpec((tm, _PACK * _F_IN), lambda i: (i, 0)),
            pl.BlockSpec(w_slab.shape, lambda i: (0, 0, 0)),  # VMEM-resident
            pl.BlockSpec(b_slab.shape, lambda i: (0, 0)),     # VMEM-resident
        ],
        out_specs=pl.BlockSpec((tm, n_out), lambda i: (i, 0)),
        compiler_params=pltpu.CompilerParams(
            dimension_semantics=("parallel",),
            vmem_limit_bytes=vmem_limit,
        ),
        cost_estimate=cost,
    )(xp, w_slab, b_slab)

    # (bp, 8) -> (B, 2): contiguous row-major unpack, free at XLA level.
    return out_packed.reshape(b_pad, _F_OUT)[:B]


def init_params(key):
    """PyTorch nn.Linear default init (U[-1/sqrt(fan_in), +]); all float32."""
    ks = jax.random.split(key, 6)

    def linear(kw, kb, fan_in, fan_out):
        bound = fan_in ** -0.5
        w = jax.random.uniform(kw, (fan_in, fan_out), jnp.float32, -bound, bound)
        b = jax.random.uniform(kb, (fan_out,), jnp.float32, -bound, bound)
        return w, b

    w1, b1 = linear(ks[0], ks[1], _F_IN, _H1)
    w2, b2 = linear(ks[2], ks[3], _H1, _H2)
    w3, b3 = linear(ks[4], ks[5], _H2, _F_OUT)
    return {"w1": w1, "b1": b1, "w2": w2, "b2": b2, "w3": w3, "b3": b3}


def _reference(x, p):
    h = jnp.maximum(jnp.dot(x, p["w1"]) + p["b1"], 0.0)
    h = jnp.maximum(jnp.dot(h, p["w2"]) + p["b2"], 0.0)
    return jax.nn.sigmoid(jnp.dot(h, p["w3"]) + p["b3"])


if __name__ == "__main__":
    key = jax.random.PRNGKey(0)
    k_x, k_p = jax.random.split(key)

    batch = 512
    x = jax.random.normal(k_x, (batch, _F_IN), jnp.float32)
    params = init_params(k_p)

    fwd = jax.jit(mlp_forward)
    out = jax.block_until_ready(fwd(x, params))

    ref = _reference(x, params)
    assert out.shape == (batch, _F_OUT), out.shape
    assert out.dtype == jnp.float32, out.dtype
    assert jnp.allclose(out, ref, atol=2e-3, rtol=2e-3), "mismatch vs pure-JAX reference"
    print("KERNEL_OK")
</pallas_src>

<mosaic_0001>
module attributes {stable_mosaic.version = 11 : i64} {
  func.func @_mlp_kernel(%arg0: i32, %arg1: memref<64x128xf32, #tpu.memory_space<vmem>>, %arg2: memref<3x128x64xf32, #tpu.memory_space<vmem>>, %arg3: memref<3x64xf32, #tpu.memory_space<vmem>>, %arg4: memref<64x8xf32, #tpu.memory_space<vmem>>) attributes {dimension_semantics = [#tpu.dimension_semantics<parallel>], iteration_bounds = array<i64: 2>, scalar_prefetch = 0 : i64, scratch_operands = 0 : i64, tpu.core_type = #tpu.core_type<tc>, window_params = [{transform_indices = @transform_0, window_bounds = array<i64: 64, 128>}, {pipeline_mode = #tpu.pipeline_mode<synchronous>, transform_indices = @transform_1, window_bounds = array<i64: 3, 128, 64>}, {pipeline_mode = #tpu.pipeline_mode<synchronous>, transform_indices = @transform_2, window_bounds = array<i64: 3, 64>}, {transform_indices = @transform_3, window_bounds = array<i64: 64, 8>}]} {
    %c0 = arith.constant 0 : index
    %c0_0 = arith.constant 0 : index
    %0 = vector.load %arg1[%c0, %c0_0] : memref<64x128xf32, #tpu.memory_space<vmem>>, vector<64x128xf32>
    %c0_1 = arith.constant 0 : index
    %c0_2 = arith.constant 0 : index
    %1 = vector.load %arg3[%c0_1, %c0_2] : memref<3x64xf32, #tpu.memory_space<vmem>>, vector<3x64xf32>
    %c0_3 = arith.constant 0 : index
    %c0_4 = arith.constant 0 : index
    %c0_5 = arith.constant 0 : index
    %2 = vector.load %arg2[%c0_3, %c0_4, %c0_5] : memref<3x128x64xf32, #tpu.memory_space<vmem>>, vector<1x128x64xf32>
    %3 = vector.shape_cast %2 : vector<1x128x64xf32> to vector<128x64xf32>
    %cst = arith.constant dense<0.000000e+00> : vector<64x64xf32>
    %4 = tpu.matmul %0, %3, %cst {dimension_numbers = #tpu.dot_dimension_numbers<[1], [0], [0], [1], [0, 0, 1, 1], [], []>} : vector<64x128xf32>, vector<128x64xf32>, vector<64x64xf32> -> vector<64x64xf32>
    %5 = vector.extract_strided_slice %1 {offsets = [0, 0], sizes = [1, 64], strides = [1, 1]} : vector<3x64xf32> to vector<1x64xf32>
    %6 = vector.broadcast %5 : vector<1x64xf32> to vector<64x64xf32>
    %7 = arith.addf %4, %6 : vector<64x64xf32>
    %cst_6 = arith.constant 0.000000e+00 : f32
    %8 = vector.broadcast %cst_6 : f32 to vector<64x64xf32>
    %9 = arith.maximumf %7, %8 : vector<64x64xf32>
    %c1 = arith.constant 1 : index
    %c0_7 = arith.constant 0 : index
    %c0_8 = arith.constant 0 : index
    %10 = vector.load %arg2[%c1, %c0_7, %c0_8] : memref<3x128x64xf32, #tpu.memory_space<vmem>>, vector<1x128x64xf32>
    %11 = vector.shape_cast %10 : vector<1x128x64xf32> to vector<128x64xf32>
    %12 = vector.extract_strided_slice %11 {offsets = [0, 0], sizes = [64, 32], strides = [1, 1]} : vector<128x64xf32> to vector<64x32xf32>
    %cst_9 = arith.constant dense<0.000000e+00> : vector<64x32xf32>
    %13 = tpu.matmul %9, %12, %cst_9 {dimension_numbers = #tpu.dot_dimension_numbers<[1], [0], [0], [1], [0, 0, 1, 1], [], []>} : vector<64x64xf32>, vector<64x32xf32>, vector<64x32xf32> -> vector<64x32xf32>
    %14 = vector.extract_strided_slice %1 {offsets = [1, 0], sizes = [1, 32], strides = [1, 1]} : vector<3x64xf32> to vector<1x32xf32>
    %15 = vector.broadcast %14 : vector<1x32xf32> to vector<64x32xf32>
    %16 = arith.addf %13, %15 : vector<64x32xf32>
    %cst_10 = arith.constant 0.000000e+00 : f32
    %17 = vector.broadcast %cst_10 : f32 to vector<64x32xf32>
    %18 = arith.maximumf %16, %17 : vector<64x32xf32>
    %c2 = arith.constant 2 : index
    %c0_11 = arith.constant 0 : index
    %c0_12 = arith.constant 0 : index
    %19 = vector.load %arg2[%c2, %c0_11, %c0_12] : memref<3x128x64xf32, #tpu.memory_space<vmem>>, vector<1x128x64xf32>
    %20 = vector.shape_cast %19 : vector<1x128x64xf32> to vector<128x64xf32>
    %21 = vector.extract_strided_slice %20 {offsets = [0, 0], sizes = [32, 8], strides = [1, 1]} : vector<128x64xf32> to vector<32x8xf32>
    %cst_13 = arith.constant dense<0.000000e+00> : vector<64x8xf32>
    %22 = tpu.matmul %18, %21, %cst_13 {dimension_numbers = #tpu.dot_dimension_numbers<[1], [0], [0], [1], [0, 0, 1, 1], [], []>} : vector<64x32xf32>, vector<32x8xf32>, vector<64x8xf32> -> vector<64x8xf32>
    %23 = vector.extract_strided_slice %1 {offsets = [2, 0], sizes = [1, 8], strides = [1, 1]} : vector<3x64xf32> to vector<1x8xf32>
    %24 = vector.broadcast %23 : vector<1x8xf32> to vector<64x8xf32>
    %25 = arith.addf %22, %24 : vector<64x8xf32>
    %26 = arith.negf %25 : vector<64x8xf32>
    %27 = math.exp %26 : vector<64x8xf32>
    %cst_14 = arith.constant 1.000000e+00 : f32
    %28 = vector.broadcast %cst_14 : f32 to vector<64x8xf32>
    %29 = arith.addf %28, %27 : vector<64x8xf32>
    %30 = arith.divf %28, %29 : vector<64x8xf32>
    %c0_15 = arith.constant 0 : index
    %c0_16 = arith.constant 0 : index
    %31 = vector.load %arg4[%c0_15, %c0_16] : memref<64x8xf32, #tpu.memory_space<vmem>>, vector<64x8xf32>
    tpu.vector_store %arg4[%c0_15, %c0_16], %30 {strides = array<i32>} : memref<64x8xf32, #tpu.memory_space<vmem>>, vector<64x8xf32>,
    return
  }
  func.func @transform_0(%arg0: i32) -> (i32, i32) {
    %c0_i32 = arith.constant 0 : i32
    %c0_i32_0 = arith.constant 0 : i32
    return %arg0, %c0_i32 : i32, i32
  }
  func.func @transform_1(%arg0: i32) -> (i32, i32, i32) {
    %c0_i32 = arith.constant 0 : i32
    %c0_i32_0 = arith.constant 0 : i32
    %c0_i32_1 = arith.constant 0 : i32
    %c0_i32_2 = arith.constant 0 : i32
    return %c0_i32, %c0_i32_0, %c0_i32_1 : i32, i32, i32
  }
  func.func @transform_2(%arg0: i32) -> (i32, i32) {
    %c0_i32 = arith.constant 0 : i32
    %c0_i32_0 = arith.constant 0 : i32
    %c0_i32_1 = arith.constant 0 : i32
    return %c0_i32, %c0_i32_0 : i32, i32
  }
  func.func @transform_3(%arg0: i32) -> (i32, i32) {
    %c0_i32 = arith.constant 0 : i32
    %c0_i32_0 = arith.constant 0 : i32
    return %arg0, %c0_i32 : i32, i32
  }
}

</mosaic_0001>

<llo_original>
// kernel: tile.18
$region0: #{tile.18}
  #allocation0 [shape = 's32[1]{0}', space=sflag, size = 0x4, scoped, tag = 'scoped memory for tile.18']
  %s0 = inlined_call_operand.vmem [shape: f32[16], index: 0, kind: input, shape index: {}]
  %s1 = inlined_call_operand.vmem [shape: f32[4,16], index: 1, kind: output, shape index: {}]
  // Predicated region
  $region2: #{tile.18} parent=0 // pred_check
    _
  $region3: #{tile.18} parent=0 // pred_check_branch
    %3 = sbr.rel (0) target = $region5
  $region4: #{tile.18} parent=0 // pred_region
    _
  $region5: #{tile.18} parent=0 // pred_fallthru
    _
  %v4 = vld [vmem:[%s0] ss:$0 sm:$0xff]
  %5 = vst [vmem:[%s1] sm:$0xf] %v4

// kernel: tile.23
$region0: #{tile.23}
  #allocation0 [shape = 's32[1]{0}', space=sflag, size = 0x4, scoped, tag = 'scoped memory for tile.23']
  %s0 = inlined_call_operand.vmem [shape: f32[8], index: 0, kind: input, shape index: {}]
  %s1 = inlined_call_operand.vmem [shape: f32[4,8], index: 1, kind: output, shape index: {}]
  // Predicated region
  $region2: #{tile.23} parent=0 // pred_check
    _
  $region3: #{tile.23} parent=0 // pred_check_branch
    %3 = sbr.rel (0) target = $region5
  $region4: #{tile.23} parent=0 // pred_region
    _
  $region5: #{tile.23} parent=0 // pred_fallthru
    _
  %v4 = vld [vmem:[%s0] ss:$0 sm:$0xff]
  %5 = vst [vmem:[%s1] sm:$0xf] %v4

// kernel: tile.28
$region0: #{tile.28}
  #allocation0 [shape = 's32[1]{0}', space=sflag, size = 0x4, scoped, tag = 'scoped memory for tile.28']
  %s0 = inlined_call_operand.vmem [shape: f32[2], index: 0, kind: input, shape index: {}]
  %s1 = inlined_call_operand.vmem [shape: f32[4,2], index: 1, kind: output, shape index: {}]
  // Predicated region
  $region2: #{tile.28} parent=0 // pred_check
    _
  $region3: #{tile.28} parent=0 // pred_check_branch
    %3 = sbr.rel (0) target = $region5
  $region4: #{tile.28} parent=0 // pred_region
    _
  $region5: #{tile.28} parent=0 // pred_fallthru
    _
  %v4 = vld [vmem:[%s0] ss:$0 sm:$0xff]
  %5 = vst [vmem:[%s1] sm:$0xf] %v4

// kernel: mlp_forward.1
$region0: #{mlp_forward.1}
  #allocation0 [shape = 'u32[]', space=smem, size = 0x4, offset = 0x4, fixed_abs, tag = 'smem constant byte address 0x4 - core index']
  #allocation1 [shape = 'u32[144,128]{1,0:T(1,128)}', space=vmem, size = 0x12000, scoped, tag = 'internal scratch']
  %s0 = inlined_call_operand.vmem [shape: f32[128,128], index: 0, kind: input, shape index: {}]
  %s1 = inlined_call_operand.vmem [shape: f32[3,128,64], index: 1, kind: input, shape index: {}]
  %s2 = inlined_call_operand.vmem [shape: f32[3,64], index: 2, kind: input, shape index: {}]
  %s3 = inlined_call_operand.vmem [shape: f32[128,8], index: 3, kind: output, shape index: {}]
  %s4 = sld [smem:[#allocation0]]
  $region45: #{mlp_forward.1} parent=0
    _
  %s6 = ssub.s32 1, %s4
  %s7 = scalar_select 0, %s6, %s4
  loop: start=0, step=1, limit=4
  $region2: #{mlp_forward.1} parent=0 // loop_pre_header
    _
  $region3: #{mlp_forward.1} parent=0 // loop_header
    %s9 = sphi 0, %s13
    %p10 = scmp.ge.s32.totalorder %s9, 4
    %s19 = sphi 0, %s21
    %s22 = sphi 0, %s19
    %s23 = sphi 0, %s22
    %s39 = sphi 0, %s23
    %s43 = sphi 0, %s43
    %s45 = sphi 0, %s43
    %s46 = sphi 0, %s45
    %s60 = sphi 0, %s46
    %s64 = sphi 0, %s64
    %s66 = sphi 0, %s64
    %s67 = sphi 0, %s66
    %s81 = sphi 0, %s67
    %s87 = sphi 0, %s89
    %s90 = sphi 0, %s87
    %s91 = sphi 0, %s90
    %s107 = sphi 0, %s91
  $region4: #{mlp_forward.1} parent=0 // loop_header_branch
    %12 = sbr.rel (%p10) target = $region8
  $region5: #{mlp_forward.1} parent=0 // loop_body
    %s14 = ssub.s32 %s9, 1
    %s15 = ssub.s32 %s9, 2
    %s16 = sadd.s32 %s9, 1
    %s17 = ssub.s32 %s9, %s16
    %p18 = scmp.eq.s32.totalorder %s17, 0
    %s20 = sadd.s32 %s19, 1
    %s21 = scalar_select %p18, %s19, %s20
    %p24 = pneg %p18
    %p25 = scmp.eq.s32.totalorder %s9, 1
    %p26 = por %p24, %p25
    %p27 = scmp.ne.s32.totalorder %s19, %s22
    %p28 = scmp.eq.s32.totalorder %s9, 0
    %p29 = por %p27, %p28
    %p30 = scmp.ne.s32.totalorder %s19, %s22
    %p31 = scmp.eq.s32.totalorder %s14, 1
    %p32 = por %p30, %p31
    %p33 = scmp.ne.s32.totalorder %s22, %s23
    %p34 = scmp.eq.s32.totalorder %s14, 0
    %p35 = por %p33, %p34
    %p36 = scmp.ne.s32.totalorder %s22, %s23
    %p37 = scmp.eq.s32.totalorder %s15, 1
    %p38 = por %p36, %p37
    %p40 = scmp.ne.s32.totalorder %s23, %s39
    %p41 = scmp.eq.s32.totalorder %s15, 0
    %p42 = por %p40, %p41
    %s44 = sadd.s32 %s43, 1
    %p47 = scmp.eq.s32.totalorder %s9, 1
    %p48 = scmp.ne.s32.totalorder %s43, %s45
    %p49 = scmp.eq.s32.totalorder %s9, 0
    %p50 = por %p48, %p49
    %p51 = scmp.ne.s32.totalorder %s43, %s45
    %p52 = scmp.eq.s32.totalorder %s14, 1
    %p53 = por %p51, %p52
    %p54 = scmp.ne.s32.totalorder %s45, %s46
    %p55 = scmp.eq.s32.totalorder %s14, 0
    %p56 = por %p54, %p55
    %p57 = scmp.ne.s32.totalorder %s45, %s46
    %p58 = scmp.eq.s32.totalorder %s15, 1
    %p59 = por %p57, %p58
    %p61 = scmp.ne.s32.totalorder %s46, %s60
    %p62 = scmp.eq.s32.totalorder %s15, 0
    %p63 = por %p61, %p62
    %s65 = sadd.s32 %s64, 1
    %p68 = scmp.eq.s32.totalorder %s9, 1
    %p69 = scmp.ne.s32.totalorder %s64, %s66
    %p70 = scmp.eq.s32.totalorder %s9, 0
    %p71 = por %p69, %p70
    %p72 = scmp.ne.s32.totalorder %s64, %s66
    %p73 = scmp.eq.s32.totalorder %s14, 1
    %p74 = por %p72, %p73
    %p75 = scmp.ne.s32.totalorder %s66, %s67
    %p76 = scmp.eq.s32.totalorder %s14, 0
    %p77 = por %p75, %p76
    %p78 = scmp.ne.s32.totalorder %s66, %s67
    %p79 = scmp.eq.s32.totalorder %s15, 1
    %p80 = por %p78, %p79
    %p82 = scmp.ne.s32.totalorder %s67, %s81
    %p83 = scmp.eq.s32.totalorder %s15, 0
    %p84 = por %p82, %p83
    %s85 = ssub.s32 %s9, %s16
    %p86 = scmp.eq.s32.totalorder %s85, 0
    %s88 = sadd.s32 %s87, 1
    %s89 = scalar_select %p86, %s87, %s88
    %p92 = pneg %p86
    %p93 = scmp.eq.s32.totalorder %s9, 1
    %p94 = por %p92, %p93
    %p95 = scmp.ne.s32.totalorder %s87, %s90
    %p96 = scmp.eq.s32.totalorder %s9, 0
    %p97 = por %p95, %p96
    %p98 = scmp.ne.s32.totalorder %s87, %s90
    %p99 = scmp.eq.s32.totalorder %s14, 1
    %p100 = por %p98, %p99
    %p101 = scmp.ne.s32.totalorder %s90, %s91
    %p102 = scmp.eq.s32.totalorder %s14, 0
    %p103 = por %p101, %p102
    %p104 = scmp.ne.s32.totalorder %s90, %s91
    %p105 = scmp.eq.s32.totalorder %s15, 1
    %p106 = por %p104, %p105
    %p108 = scmp.ne.s32.totalorder %s91, %s107
    %p109 = scmp.eq.s32.totalorder %s15, 0
    %p110 = por %p108, %p109
    %p111 = scmp.le.s32.totalorder 1, %s9
    %p112 = scmp.lt.s32.totalorder %s9, 3
    %p113 = pnand %p111, %p112
    %p114 = pneg %p113
    // Predicated region
    $region9: #{mlp_forward.1} parent=5 // pred_check
      _
    $region10: #{mlp_forward.1} parent=5 // pred_check_branch
      %116 = sbr.rel (%p113) target = $region12
    $region11: #{mlp_forward.1} parent=5 // pred_region
      %s117 = ssub.s32 %s9, 1
      // Predicated region
      $region13: #{mlp_forward.1} parent=11 // pred_check
        %p118 = pneg %p56
      $region14: #{mlp_forward.1} parent=11 // pred_check_branch
        %120 = sbr.rel (%p118) target = $region16
      $region15: #{mlp_forward.1} parent=11 // pred_region
        _
      $region16: #{mlp_forward.1} parent=11 // pred_fallthru
        _
      // Predicated region
      $region17: #{mlp_forward.1} parent=11 // pred_check
        %p121 = pneg %p77
      $region18: #{mlp_forward.1} parent=11 // pred_check_branch
        %123 = sbr.rel (%p121) target = $region20
      $region19: #{mlp_forward.1} parent=11 // pred_region
        _
      $region20: #{mlp_forward.1} parent=11 // pred_fallthru
        _
    $region12: #{mlp_forward.1} parent=5 // pred_fallthru
      _
    %p124 = scmp.lt.s32.totalorder %s9, 2
    // Predicated region
    $region21: #{mlp_forward.1} parent=5 // pred_check
      %p125 = pneg %p124
    $region22: #{mlp_forward.1} parent=5 // pred_check_branch
      %127 = sbr.rel (%p125) target = $region24
    $region23: #{mlp_forward.1} parent=5 // pred_region
      // Predicated region
      $region25: #{mlp_forward.1} parent=23 // pred_check
        %p128 = pneg %p29
      $region26: #{mlp_forward.1} parent=23 // pred_check_branch
        %130 = sbr.rel (%p128) target = $region28
      $region27: #{mlp_forward.1} parent=23 // pred_region
        %s131 = smul.u32 8, %s9
        %p132 = scmp.lt.s32.totalorder %s131, 15
        %s133 = scalar_select %p132, %s131, 15
        %s134 = smul.addr %s133, 8
        %s135 = scalar_lea.vmem %s0, %s134
        %s136 = smul.u32 8, %s9
      $region28: #{mlp_forward.1} parent=23 // pred_fallthru
        _
    $region24: #{mlp_forward.1} parent=5 // pred_fallthru
      _
    %p137 = scmp.le.s32.totalorder 1, %s9
    %p138 = scmp.lt.s32.totalorder %s9, 3
    %p139 = pnand %p137, %p138
    %p140 = pneg %p139
    // Predicated region
    $region29: #{mlp_forward.1} parent=5 // pred_check
      _
    $region30: #{mlp_forward.1} parent=5 // pred_check_branch
      %142 = sbr.rel (%p139) target = $region32
    $region31: #{mlp_forward.1} parent=5 // pred_region
      %s143 = ssub.s32 %s9, 1
      %s144 = smul.u32 8, %s14
      %p145 = scmp.lt.s32.totalorder %s144, 15
      %s146 = scalar_select %p145, %s144, 15
      %s147 = smul.addr %s146, 8
      %s148 = scalar_lea.vmem %s0, %s147
      %p149 = pneg %p35
      %p150 = pneg %p32
      %p151 = pneg %p56
      %p152 = pneg %p53
      %p153 = pneg %p77
      %p154 = pneg %p74
      %p155 = pneg %p103
      %p156 = pneg %p100
      %s157 = smul.u32 8, %s14
      %p158 = scmp.lt.s32.totalorder %s157, 15
      %s159 = scalar_select %p158, %s157, 15
      %s160 = smul.addr %s159, 8
      %s161 = scalar_lea.vmem %s3, %s160
      %s162 = smul.u32 8, %s14
      %p163 = scmp.lt.s32.totalorder %s162, 15
      %s164 = scalar_select %p163, %s162, 15
      %s165 = smul.addr %s164, 8
      %s166 = scalar_lea.vmem %s0, %s165
      %s167 = smul.u32 8, %s14
      %s168 = smul.u32 8, %s14
      %p169 = scmp.lt.s32.totalorder %s168, 15
      %s170 = scalar_select %p169, %s168, 15
      %s171 = smul.addr %s170, 8
      %s172 = scalar_lea.vmem %s3, %s171
      %s173 = smul.u32 8, %s14
      %v174 = vld [vmem:[%s166] sm:$0xff]
      %v175 = vld [vmem:[%s166 + $0x8] sm:$0xff]
      %v176 = vld [vmem:[%s166 + $0x10] sm:$0xff]
      %v177 = vld [vmem:[%s166 + $0x18] sm:$0xff]
      %v178 = vld [vmem:[%s166 + $0x20] sm:$0xff]
      %v179 = vld [vmem:[%s166 + $0x28] sm:$0xff]
      %v180 = vld [vmem:[%s166 + $0x30] sm:$0xff]
      %v181 = vld [vmem:[%s166 + $0x38] sm:$0xff]
      %v182 = vld [vmem:[%s2] sm:$0x7]
      %v183 = vld [vmem:[%s1] sm:$0xff]
      %v184 = vld [vmem:[%s1 + $0x8] sm:$0xff]
      %v185 = vld [vmem:[%s1 + $0x10] sm:$0xff]
      %v186 = vld [vmem:[%s1 + $0x18] sm:$0xff]
      %v187 = vld [vmem:[%s1 + $0x20] sm:$0xff]
      %v188 = vld [vmem:[%s1 + $0x28] sm:$0xff]
      %v189 = vld [vmem:[%s1 + $0x30] sm:$0xff]
      %v190 = vld [vmem:[%s1 + $0x38] sm:$0xff]
      %v191 = vld [vmem:[%s1 + $0x40] sm:$0xff]
      %v192 = vld [vmem:[%s1 + $0x48] sm:$0xff]
      %v193 = vld [vmem:[%s1 + $0x50] sm:$0xff]
      %v194 = vld [vmem:[%s1 + $0x58] sm:$0xff]
      %v195 = vld [vmem:[%s1 + $0x60] sm:$0xff]
      %v196 = vld [vmem:[%s1 + $0x68] sm:$0xff]
      %v197 = vld [vmem:[%s1 + $0x70] sm:$0xff]
      %v198 = vld [vmem:[%s1 + $0x78] sm:$0xff]
      %v199 = vlaneseq
      %v200 = vshrl.u32 %v199, 7
      %v201 = vsub.s32 0, %v200
      %v202 = vrot.slane %v182, %v201
      %203 = vmatprep.subr.mxu0 0.0
      %204 = vmatpush1.msra.mxu0 %v198
      %205 = vmatprep.subr.mxu0 0.0
      %206 = vmatpush1.msra.mxu0 %v197
      %207 = vmatprep.subr.mxu0 0.0
      %208 = vmatpush1.msra.mxu0 %v196
      %209 = vmatprep.subr.mxu0 0.0
      %210 = vmatpush1.msra.mxu0 %v195
      %211 = vmatprep.subr.mxu0 0.0
      %212 = vmatpush1.msra.mxu0 %v194
      %213 = vmatprep.subr.mxu0 0.0
      %214 = vmatpush1.msra.mxu0 %v193
      %215 = vmatprep.subr.mxu0 0.0
      %216 = vmatpush1.msra.mxu0 %v192
      %217 = vmatprep.subr.mxu0 0.0
      %218 = vmatpush1.msra.mxu0 %v191
      %219 = vmatprep.subr.mxu0 0.0
      %220 = vmatpush1.msra.mxu0 %v190
      %221 = vmatprep.subr.mxu0 0.0
      %222 = vmatpush1.msra.mxu0 %v189
      %223 = vmatprep.subr.mxu0 0.0
      %224 = vmatpush1.msra.mxu0 %v188
      %225 = vmatprep.subr.mxu0 0.0
      %226 = vmatpush1.msra.mxu0 %v187
      %227 = vmatprep.subr.mxu0 0.0
      %228 = vmatpush1.msra.mxu0 %v186
      %229 = vmatprep.subr.mxu0 0.0
      %230 = vmatpush1.msra.mxu0 %v185
      %231 = vmatprep.subr.mxu0 0.0
      %232 = vmatpush1.msra.mxu0 %v184
      %233 = vmatprep.subr.mxu0 0.0
      %234 = vmatpush1.msra.mxu0 %v183
      %235 = vmatprep.subr.mxu0 0.0
      %236 = vmatpush2.msra.mxu0 0.0
      %237 = vmatprep.subr.mxu0 0.0
      %238 = vmatpush2.msra.mxu0 0.0
      %239 = vmatprep.subr.mxu0 0.0
      %240 = vmatpush2.msra.mxu0 0.0
      %241 = vmatprep.subr.mxu0 0.0
      %242 = vmatpush2.msra.mxu0 0.0
      %243 = vmatprep.subr.mxu0 0.0
      %244 = vmatpush2.msra.mxu0 0.0
      %245 = vmatprep.subr.mxu0 0.0
      %246 = vmatpush2.msra.mxu0 0.0
      %247 = vmatprep.subr.mxu0 0.0
      %248 = vmatpush2.msra.mxu0 0.0
      %249 = vmatprep.subr.mxu0 0.0
      %250 = vmatpush2.msra.mxu0 0.0
      %251 = vmatprep.subr.mxu0 0.0
      %252 = vmatpush2.msra.mxu0 0.0
      %253 = vmatprep.subr.mxu0 0.0
      %254 = vmatpush2.msra.mxu0 0.0
      %255 = vmatprep.subr.mxu0 0.0
      %256 = vmatpush2.msra.mxu0 0.0
      %257 = vmatprep.subr.mxu0 0.0
      %258 = vmatpush2.msra.mxu0 0.0
      %259 = vmatprep.subr.mxu0 0.0
      %260 = vmatpush2.msra.mxu0 0.0
      %261 = vmatprep.subr.mxu0 0.0
      %262 = vmatpush2.msra.mxu0 0.0
      %263 = vmatprep.subr.mxu0 0.0
      %264 = vmatpush2.msra.mxu0 0.0
      %265 = vmatprep.subr.mxu0 0.0
      %266 = vmatpush2.msra.mxu0 0.0
      %267 = vmatprep.mubr.f32.mxu0 0.0
      %268 = vmatmul.mubr.f32.gmra.mxu0 %v174
      %v269 = vpop.f32.mrf.mxu0
      %v270 = vadd.f32 %v202, %v269
      %v271 = vpop.f32.mrf.mxu0
      %272 = vmatprep.mubr.f32.mxu0 0.0
      %273 = vmatmul.mubr.f32.gmra.mxu0 %v175
      %v274 = vpop.f32.mrf.mxu0
      %v275 = vadd.f32 %v202, %v274
      %v276 = vpop.f32.mrf.mxu0
      %277 = vmatprep.mubr.f32.mxu0 0.0
      %278 = vmatmul.mubr.f32.gmra.mxu0 %v176
      %v279 = vpop.f32.mrf.mxu0
      %v280 = vadd.f32 %v202, %v279
      %v281 = vpop.f32.mrf.mxu0
      %282 = vmatprep.mubr.f32.mxu0 0.0
      %283 = vmatmul.mubr.f32.gmra.mxu0 %v177
      %v284 = vpop.f32.mrf.mxu0
      %v285 = vadd.f32 %v202, %v284
      %v286 = vpop.f32.mrf.mxu0
      %287 = vmatprep.mubr.f32.mxu0 0.0
      %288 = vmatmul.mubr.f32.gmra.mxu0 %v178
      %v289 = vpop.f32.mrf.mxu0
      %v290 = vadd.f32 %v202, %v289
      %v291 = vpop.f32.mrf.mxu0
      %292 = vmatprep.mubr.f32.mxu0 0.0
      %293 = vmatmul.mubr.f32.gmra.mxu0 %v179
      %v294 = vpop.f32.mrf.mxu0
      %v295 = vadd.f32 %v202, %v294
      %v296 = vpop.f32.mrf.mxu0
      %297 = vmatprep.mubr.f32.mxu0 0.0
      %298 = vmatmul.mubr.f32.gmra.mxu0 %v180
      %v299 = vpop.f32.mrf.mxu0
      %v300 = vadd.f32 %v202, %v299
      %v301 = vpop.f32.mrf.mxu0
      %302 = vmatprep.mubr.f32.mxu0 0.0
      %303 = vmatmul.mubr.f32.gmra.mxu0 %v181
      %v304 = vpop.f32.mrf.mxu0
      %v305 = vadd.f32 %v202, %v304
      %v306 = vpop.f32.mrf.mxu0
      %307 = vdwg.mxu0
      %v308 = vmax.f32 %v270, 0.0
      %v309 = vmax.f32 %v275, 0.0
      %v310 = vmax.f32 %v280, 0.0
      %v311 = vmax.f32 %v285, 0.0
      %v312 = vmax.f32 %v290, 0.0
      %v313 = vmax.f32 %v295, 0.0
      %v314 = vmax.f32 %v300, 0.0
      %v315 = vmax.f32 %v305, 0.0
      %s316 = scalar_lea.vmem %s1, 128
      %v317 = vld [vmem:[%s316] sm:$0xff]
      %v318 = vld [vmem:[%s316 + $0x8] sm:$0xff]
      %v319 = vld [vmem:[%s316 + $0x10] sm:$0xff]
      %v320 = vld [vmem:[%s316 + $0x18] sm:$0xff]
      %v321 = vld [vmem:[%s316 + $0x20] sm:$0xff]
      %v322 = vld [vmem:[%s316 + $0x28] sm:$0xff]
      %v323 = vld [vmem:[%s316 + $0x30] sm:$0xff]
      %v324 = vld [vmem:[%s316 + $0x38] sm:$0xff]
      %v325 = vlaneseq
      %v326 = vshrl.u32 %v325, 7
      %v327 = vsub.s32 1, %v326
      %v328 = vrot.slane %v182, %v327
      %vm329 = vcmask 523264
      %v331 = vsel %vm329, %v308, 0
      %v334 = vsel %vm329, %v309, 0
      %v337 = vsel %vm329, %v310, 0
      %v340 = vsel %vm329, %v311, 0
      %v343 = vsel %vm329, %v312, 0
      %v346 = vsel %vm329, %v313, 0
      %v349 = vsel %vm329, %v314, 0
      %v352 = vsel %vm329, %v315, 0
      %354 = vmatprep.subr.mxu0 0.0
      %355 = vmatpush1.msra.mxu0 0.0
      %356 = vmatprep.subr.mxu0 0.0
      %357 = vmatpush1.msra.mxu0 0.0
      %358 = vmatprep.subr.mxu0 0.0
      %359 = vmatpush1.msra.mxu0 0.0
      %360 = vmatprep.subr.mxu0 0.0
      %361 = vmatpush1.msra.mxu0 0.0
      %362 = vmatprep.subr.mxu0 0.0
      %363 = vmatpush1.msra.mxu0 0.0
      %364 = vmatprep.subr.mxu0 0.0
      %365 = vmatpush1.msra.mxu0 0.0
      %366 = vmatprep.subr.mxu0 0.0
      %367 = vmatpush1.msra.mxu0 0.0
      %368 = vmatprep.subr.mxu0 0.0
      %369 = vmatpush1.msra.mxu0 0.0
      %370 = vmatprep.subr.mxu0 0.0
      %371 = vmatpush1.msra.mxu0 %v324
      %372 = vmatprep.subr.mxu0 0.0
      %373 = vmatpush1.msra.mxu0 %v323
      %374 = vmatprep.subr.mxu0 0.0
      %375 = vmatpush1.msra.mxu0 %v322
      %376 = vmatprep.subr.mxu0 0.0
      %377 = vmatpush1.msra.mxu0 %v321
      %378 = vmatprep.subr.mxu0 0.0
      %379 = vmatpush1.msra.mxu0 %v320
      %380 = vmatprep.subr.mxu0 0.0
      %381 = vmatpush1.msra.mxu0 %v319
      %382 = vmatprep.subr.mxu0 0.0
      %383 = vmatpush1.msra.mxu0 %v318
      %384 = vmatprep.subr.mxu0 0.0
      %385 = vmatpush1.msra.mxu0 %v317
      %386 = vmatprep.subr.mxu0 0.0
      %387 = vmatpush2.msra.mxu0 0.0
      %388 = vmatprep.subr.mxu0 0.0
      %389 = vmatpush2.msra.mxu0 0.0
      %390 = vmatprep.subr.mxu0 0.0
      %391 = vmatpush2.msra.mxu0 0.0
      %392 = vmatprep.subr.mxu0 0.0
      %393 = vmatpush2.msra.mxu0 0.0
      %394 = vmatprep.subr.mxu0 0.0
      %395 = vmatpush2.msra.mxu0 0.0
      %396 = vmatprep.subr.mxu0 0.0
      %397 = vmatpush2.msra.mxu0 0.0
      %398 = vmatprep.subr.mxu0 0.0
      %399 = vmatpush2.msra.mxu0 0.0
      %400 = vmatprep.subr.mxu0 0.0
      %401 = vmatpush2.msra.mxu0 0.0
      %402 = vmatprep.subr.mxu0 0.0
      %403 = vmatpush2.msra.mxu0 0.0
      %404 = vmatprep.subr.mxu0 0.0
      %405 = vmatpush2.msra.mxu0 0.0
      %406 = vmatprep.subr.mxu0 0.0
      %407 = vmatpush2.msra.mxu0 0.0
      %408 = vmatprep.subr.mxu0 0.0
      %409 = vmatpush2.msra.mxu0 0.0
      %410 = vmatprep.subr.mxu0 0.0
      %411 = vmatpush2.msra.mxu0 0.0
      %412 = vmatprep.subr.mxu0 0.0
      %413 = vmatpush2.msra.mxu0 0.0
      %414 = vmatprep.subr.mxu0 0.0
      %415 = vmatpush2.msra.mxu0 0.0
      %416 = vmatprep.subr.mxu0 0.0
      %417 = vmatpush2.msra.mxu0 0.0
      %418 = vmatprep.mubr.f32.mxu0 0.0
      %419 = vmatmul.mubr.f32.gmra.mxu0 %v331
      %v420 = vpop.f32.mrf.mxu0
      %v421 = vadd.f32 %v328, %v420
      %v422 = vpop.f32.mrf.mxu0
      %423 = vmatprep.mubr.f32.mxu0 0.0
      %424 = vmatmul.mubr.f32.gmra.mxu0 %v334
      %v425 = vpop.f32.mrf.mxu0
      %v426 = vadd.f32 %v328, %v425
      %v427 = vpop.f32.mrf.mxu0
      %428 = vmatprep.mubr.f32.mxu0 0.0
      %429 = vmatmul.mubr.f32.gmra.mxu0 %v337
      %v430 = vpop.f32.mrf.mxu0
      %v431 = vadd.f32 %v328, %v430
      %v432 = vpop.f32.mrf.mxu0
      %433 = vmatprep.mubr.f32.mxu0 0.0
      %434 = vmatmul.mubr.f32.gmra.mxu0 %v340
      %v435 = vpop.f32.mrf.mxu0
      %v436 = vadd.f32 %v328, %v435
      %v437 = vpop.f32.mrf.mxu0
      %438 = vmatprep.mubr.f32.mxu0 0.0
      %439 = vmatmul.mubr.f32.gmra.mxu0 %v343
      %v440 = vpop.f32.mrf.mxu0
      %v441 = vadd.f32 %v328, %v440
      %v442 = vpop.f32.mrf.mxu0
      %443 = vmatprep.mubr.f32.mxu0 0.0
      %444 = vmatmul.mubr.f32.gmra.mxu0 %v346
      %v445 = vpop.f32.mrf.mxu0
      %v446 = vadd.f32 %v328, %v445
      %v447 = vpop.f32.mrf.mxu0
      %448 = vmatprep.mubr.f32.mxu0 0.0
      %449 = vmatmul.mubr.f32.gmra.mxu0 %v349
      %v450 = vpop.f32.mrf.mxu0
      %v451 = vadd.f32 %v328, %v450
      %v452 = vpop.f32.mrf.mxu0
      %453 = vmatprep.mubr.f32.mxu0 0.0
      %454 = vmatmul.mubr.f32.gmra.mxu0 %v352
      %v455 = vpop.f32.mrf.mxu0
      %v456 = vadd.f32 %v328, %v455
      %v457 = vpop.f32.mrf.mxu0
      %458 = vdwg.mxu0
      %v459 = vmax.f32 %v421, 0.0
      %v460 = vmax.f32 %v426, 0.0
      %v461 = vmax.f32 %v431, 0.0
      %v462 = vmax.f32 %v436, 0.0
      %v463 = vmax.f32 %v441, 0.0
      %v464 = vmax.f32 %v446, 0.0
      %v465 = vmax.f32 %v451, 0.0
      %v466 = vmax.f32 %v456, 0.0
      %s467 = scalar_lea.vmem %s1, 256
      %v468 = vld [vmem:[%s467] sm:$0xff]
      %v469 = vld [vmem:[%s467 + $0x8] sm:$0xff]
      %v470 = vld [vmem:[%s467 + $0x10] sm:$0xff]
      %v471 = vld [vmem:[%s467 + $0x18] sm:$0xff]
      %v472 = vlaneseq
      %v473 = vshrl.u32 %v472, 7
      %v474 = vsub.s32 2, %v473
      %v475 = vrot.slane %v182, %v474
      %vm476 = vcmask 261120
      %v478 = vsel %vm476, %v459, 0
      %v481 = vsel %vm476, %v460, 0
      %v484 = vsel %vm476, %v461, 0
      %v487 = vsel %vm476, %v462, 0
      %v490 = vsel %vm476, %v463, 0
      %v493 = vsel %vm476, %v464, 0
      %v496 = vsel %vm476, %v465, 0
      %v499 = vsel %vm476, %v466, 0
      %501 = vmatprep.subr.mxu0 0.0
      %502 = vmatpush1.msra.mxu0 0.0
      %503 = vmatprep.subr.mxu0 0.0
      %504 = vmatpush1.msra.mxu0 0.0
      %505 = vmatprep.subr.mxu0 0.0
      %506 = vmatpush1.msra.mxu0 0.0
      %507 = vmatprep.subr.mxu0 0.0
      %508 = vmatpush1.msra.mxu0 0.0
      %509 = vmatprep.subr.mxu0 0.0
      %510 = vmatpush1.msra.mxu0 0.0
      %511 = vmatprep.subr.mxu0 0.0
      %512 = vmatpush1.msra.mxu0 0.0
      %513 = vmatprep.subr.mxu0 0.0
      %514 = vmatpush1.msra.mxu0 0.0
      %515 = vmatprep.subr.mxu0 0.0
      %516 = vmatpush1.msra.mxu0 0.0
      %517 = vmatprep.subr.mxu0 0.0
      %518 = vmatpush1.msra.mxu0 0.0
      %519 = vmatprep.subr.mxu0 0.0
      %520 = vmatpush1.msra.mxu0 0.0
      %521 = vmatprep.subr.mxu0 0.0
      %522 = vmatpush1.msra.mxu0 0.0
      %523 = vmatprep.subr.mxu0 0.0
      %524 = vmatpush1.msra.mxu0 0.0
      %525 = vmatprep.subr.mxu0 0.0
      %526 = vmatpush1.msra.mxu0 %v471
      %527 = vmatprep.subr.mxu0 0.0
      %528 = vmatpush1.msra.mxu0 %v470
      %529 = vmatprep.subr.mxu0 0.0
      %530 = vmatpush1.msra.mxu0 %v469
      %531 = vmatprep.subr.mxu0 0.0
      %532 = vmatpush1.msra.mxu0 %v468
      %533 = vmatprep.subr.mxu0 0.0
      %534 = vmatpush2.msra.mxu0 0.0
      %535 = vmatprep.subr.mxu0 0.0
      %536 = vmatpush2.msra.mxu0 0.0
      %537 = vmatprep.subr.mxu0 0.0
      %538 = vmatpush2.msra.mxu0 0.0
      %539 = vmatprep.subr.mxu0 0.0
      %540 = vmatpush2.msra.mxu0 0.0
      %541 = vmatprep.subr.mxu0 0.0
      %542 = vmatpush2.msra.mxu0 0.0
      %543 = vmatprep.subr.mxu0 0.0
      %544 = vmatpush2.msra.mxu0 0.0
      %545 = vmatprep.subr.mxu0 0.0
      %546 = vmatpush2.msra.mxu0 0.0
      %547 = vmatprep.subr.mxu0 0.0
      %548 = vmatpush2.msra.mxu0 0.0
      %549 = vmatprep.subr.mxu0 0.0
      %550 = vmatpush2.msra.mxu0 0.0
      %551 = vmatprep.subr.mxu0 0.0
      %552 = vmatpush2.msra.mxu0 0.0
      %553 = vmatprep.subr.mxu0 0.0
      %554 = vmatpush2.msra.mxu0 0.0
      %555 = vmatprep.subr.mxu0 0.0
      %556 = vmatpush2.msra.mxu0 0.0
      %557 = vmatprep.subr.mxu0 0.0
      %558 = vmatpush2.msra.mxu0 0.0
      %559 = vmatprep.subr.mxu0 0.0
      %560 = vmatpush2.msra.mxu0 0.0
      %561 = vmatprep.subr.mxu0 0.0
      %562 = vmatpush2.msra.mxu0 0.0
      %563 = vmatprep.subr.mxu0 0.0
      %564 = vmatpush2.msra.mxu0 0.0
      %565 = vmatprep.mubr.f32.mxu0 0.0
      %566 = vmatmul.mubr.f32.gmra.mxu0 %v478
      %v567 = vpop.f32.mrf.mxu0
      %v568 = vadd.f32 %v475, %v567
      %v569 = vpop.f32.mrf.mxu0
      %570 = vmatprep.mubr.f32.mxu0 0.0
      %571 = vmatmul.mubr.f32.gmra.mxu0 %v481
      %v572 = vpop.f32.mrf.mxu0
      %v573 = vadd.f32 %v475, %v572
      %v574 = vpop.f32.mrf.mxu0
      %575 = vmatprep.mubr.f32.mxu0 0.0
      %576 = vmatmul.mubr.f32.gmra.mxu0 %v484
      %v577 = vpop.f32.mrf.mxu0
      %v578 = vadd.f32 %v475, %v577
      %v579 = vpop.f32.mrf.mxu0
      %580 = vmatprep.mubr.f32.mxu0 0.0
      %581 = vmatmul.mubr.f32.gmra.mxu0 %v487
      %v582 = vpop.f32.mrf.mxu0
      %v583 = vadd.f32 %v475, %v582
      %v584 = vpop.f32.mrf.mxu0
      %585 = vmatprep.mubr.f32.mxu0 0.0
      %586 = vmatmul.mubr.f32.gmra.mxu0 %v490
      %v587 = vpop.f32.mrf.mxu0
      %v588 = vadd.f32 %v475, %v587
      %v589 = vpop.f32.mrf.mxu0
      %590 = vmatprep.mubr.f32.mxu0 0.0
      %591 = vmatmul.mubr.f32.gmra.mxu0 %v493
      %v592 = vpop.f32.mrf.mxu0
      %v593 = vadd.f32 %v475, %v592
      %v594 = vpop.f32.mrf.mxu0
      %595 = vmatprep.mubr.f32.mxu0 0.0
      %596 = vmatmul.mubr.f32.gmra.mxu0 %v496
      %v597 = vpop.f32.mrf.mxu0
      %v598 = vadd.f32 %v475, %v597
      %v599 = vpop.f32.mrf.mxu0
      %600 = vmatprep.mubr.f32.mxu0 0.0
      %601 = vmatmul.mubr.f32.gmra.mxu0 %v499
      %v602 = vpop.f32.mrf.mxu0
      %v603 = vadd.f32 %v475, %v602
      %v604 = vpop.f32.mrf.mxu0
      %605 = vdwg.mxu0
      %v606 = vxor.u32 %v568, 2147483648
      %v607 = vxor.u32 %v573, 2147483648
      %v608 = vxor.u32 %v578, 2147483648
      %v609 = vxor.u32 %v583, 2147483648
      %v610 = vxor.u32 %v588, 2147483648
      %v611 = vxor.u32 %v593, 2147483648
      %v612 = vxor.u32 %v598, 2147483648
      %v613 = vxor.u32 %v603, 2147483648
      %v614 = vmul.f32 %v606, 1.442695
      %v615 = vpow.pop %v614
      %v616 = vmul.f32 %v607, 1.442695
      %v617 = vpow.pop %v616
      %v618 = vmul.f32 %v608, 1.442695
      %v619 = vpow.pop %v618
      %v620 = vmul.f32 %v609, 1.442695
      %v621 = vpow.pop %v620
      %v622 = vmul.f32 %v610, 1.442695
      %v623 = vpow.pop %v622
      %v624 = vmul.f32 %v611, 1.442695
      %v625 = vpow.pop %v624
      %v626 = vmul.f32 %v612, 1.442695
      %v627 = vpow.pop %v626
      %v628 = vmul.f32 %v613, 1.442695
      %v629 = vpow.pop %v628
      %v630 = vadd.f32 %v615, 1.0
      %v631 = vadd.f32 %v617, 1.0
      %v632 = vadd.f32 %v619, 1.0
      %v633 = vadd.f32 %v621, 1.0
      %v634 = vadd.f32 %v623, 1.0
      %v635 = vadd.f32 %v625, 1.0
      %v636 = vadd.f32 %v627, 1.0
      %v637 = vadd.f32 %v629, 1.0
      %v638 = vrcp.pop %v630
      %v639 = vmul.f32 1.0, %v638
      %v640 = vrcp.pop %v631
      %v641 = vmul.f32 1.0, %v640
      %v642 = vrcp.pop %v632
      %v643 = vmul.f32 1.0, %v642
      %v644 = vrcp.pop %v633
      %v645 = vmul.f32 1.0, %v644
      %v646 = vrcp.pop %v634
      %v647 = vmul.f32 1.0, %v646
      %v648 = vrcp.pop %v635
      %v649 = vmul.f32 1.0, %v648
      %v650 = vrcp.pop %v636
      %v651 = vmul.f32 1.0, %v650
      %v652 = vrcp.pop %v637
      %v653 = vmul.f32 1.0, %v652
      %vm654 = vcmask 64512
      %655 = vst.msk [vmem:[%s172] sm:$0xff] %vm654, %v639
      %656 = vst.msk [vmem:[%s172 + $0x8] sm:$0xff] %vm654, %v641
      %657 = vst.msk [vmem:[%s172 + $0x10] sm:$0xff] %vm654, %v643
      %658 = vst.msk [vmem:[%s172 + $0x18] sm:$0xff] %vm654, %v645
      %659 = vst.msk [vmem:[%s172 + $0x20] sm:$0xff] %vm654, %v647
      %660 = vst.msk [vmem:[%s172 + $0x28] sm:$0xff] %vm654, %v649
      %661 = vst.msk [vmem:[%s172 + $0x30] sm:$0xff] %vm654, %v651
      %662 = vst.msk [vmem:[%s172 + $0x38] sm:$0xff] %vm654, %v653
      %s663 = smul.u32 8, %s14
      %p664 = scmp.lt.s32.totalorder %s663, 15
      %s665 = scalar_select %p664, %s663, 15
      %s666 = smul.addr %s665, 8
      %s667 = scalar_lea.vmem %s3, %s666
      // Predicated region
      $region33: #{mlp_forward.1} parent=31 // pred_check
        %p668 = pneg %p100
      $region34: #{mlp_forward.1} parent=31 // pred_check_branch
        %670 = sbr.rel (%p668) target = $region36
      $region35: #{mlp_forward.1} parent=31 // pred_region
        %s671 = smul.u32 8, %s14
      $region36: #{mlp_forward.1} parent=31 // pred_fallthru
        _
    $region32: #{mlp_forward.1} parent=5 // pred_fallthru
      _
    %p672 = scmp.le.s32.totalorder 2, %s9
    // Predicated region
    $region37: #{mlp_forward.1} parent=5 // pred_check
      %p673 = pneg %p672
    $region38: #{mlp_forward.1} parent=5 // pred_check_branch
      %675 = sbr.rel (%p673) target = $region40
    $region39: #{mlp_forward.1} parent=5 // pred_region
      %s676 = ssub.s32 %s9, 2
      // Predicated region
      $region41: #{mlp_forward.1} parent=39 // pred_check
        %p677 = pneg %p106
      $region42: #{mlp_forward.1} parent=39 // pred_check_branch
        %679 = sbr.rel (%p677) target = $region44
      $region43: #{mlp_forward.1} parent=39 // pred_region
        %s680 = smul.u32 8, %s15
        %p681 = scmp.lt.s32.totalorder %s680, 15
        %s682 = scalar_select %p681, %s680, 15
        %s683 = smul.addr %s682, 8
        %s684 = scalar_lea.vmem %s3, %s683
      $region44: #{mlp_forward.1} parent=39 // pred_fallthru
        _
    $region40: #{mlp_forward.1} parent=5 // pred_fallthru
      _
  $region6: #{mlp_forward.1} parent=0 // loop_footer
    %s13 = sadd.s32 1, %s9
  $region7: #{mlp_forward.1} parent=0 // loop_footer_branch
    %8 = sbr.rel target = $region3
  $region8: #{mlp_forward.1} parent=0 // loop_exit
    _

</llo_original>
